<compile_context>
chip_gen: v7x
topology: tpu7x:2x2x1
jax: 0.10.0
libtpu: 0.0.40
codegen_flags: <defaults>
</compile_context>

<pallas_src>
import jax
import jax.numpy as jnp
from jax.experimental import pallas as pl
from jax.experimental.pallas import tpu as pltpu


def _round_up(x, m):
    return ((x + m - 1) // m) * m


# ----------------------------------------------------------------------------
# Fused linear kernel: out = x @ w + b   (all f32, MXU accumulate in f32)
# ----------------------------------------------------------------------------
def _linear_kernel(x_ref, w_ref, b_ref, o_ref):
    nout = o_ref.shape[-1]                     # static (2 or 3)
    acc = jnp.dot(x_ref[...], w_ref[...],      # (tm, nz) @ (nz, 128) -> (tm, 128)
                  preferred_element_type=jnp.float32)
    out = acc + b_ref[...]                     # lane-dense f32 add
    o_ref[...] = out[:, :nout].astype(o_ref.dtype)   # narrow (masked) store


def prepare_linear_params(w, b):
    """Fold PyTorch-layout Linear params into a lane-dense GEMM layout.

    w: (nout, nz), b: (nout,)  ->  w_p: (nz, 128) f32, b_p: (1, 128) f32
    Done once outside the hot forward; K (=nz) is NOT padded.
    """
    nout, nz = w.shape
    np_ = 128                                  # single lane-dense N tile
    w_p = jnp.zeros((nz, np_), jnp.float32).at[:, :nout].set(
        w.astype(jnp.float32).T)
    b_p = jnp.zeros((1, np_), jnp.float32).at[0, :nout].set(
        b.astype(jnp.float32))
    return w_p, b_p


def trans_predictor_forward(feat, w_pad, b_pad, nout):
    """feat: (B, nz) f32 -> trans: (B, nout) via a single Pallas GEMM."""
    B, nz = feat.shape
    np_ = w_pad.shape[1]

    # Row tile: large (overhead-bound otherwise), but guarantee >= 2 balanced
    # grid steps whenever B allows so v7x's two TensorCores both get work.
    tm = min(2048, _round_up(max((B + 1) // 2, 1), 8))
    mp = _round_up(B, tm)
    grid = mp // tm

    x = feat.astype(jnp.float32)
    if mp != B:                                # cheap: (mp, nz) f32, nz small
        x = jnp.zeros((mp, nz), jnp.float32).at[:B].set(x)

    # Honest VMEM budget from the actual tile footprint (+ headroom).
    f32 = 4
    vmem = (2 * tm * nz * f32                  # double-buffered x tiles
            + 2 * nz * np_ * f32               # resident weight block
            + 2 * np_ * f32                    # bias
            + 2 * tm * np_ * f32)              # output tiles (lane-padded in VMEM)
    vmem_limit = max(4 << 20, int(vmem * 1.25) + (1 << 20))

    out = pl.pallas_call(
        _linear_kernel,
        out_shape=jax.ShapeDtypeStruct((mp, nout), jnp.float32),
        grid=(grid,),
        in_specs=[
            pl.BlockSpec((tm, nz), lambda i: (i, 0)),    # feat, unpadded K
            pl.BlockSpec((nz, np_), lambda i: (0, 0)),   # weight, resident
            pl.BlockSpec((1, np_), lambda i: (0, 0)),    # bias, resident
        ],
        out_specs=pl.BlockSpec((tm, nout), lambda i: (i, 0)),  # narrow output
        compiler_params=pltpu.CompilerParams(
            dimension_semantics=("parallel",),
            vmem_limit_bytes=vmem_limit),
    )(x, w_pad, b_pad)

    return out[:B] if mp != B else out


# ----------------------------------------------------------------------------
# Deterministic parameter construction (matches TransPredictor.__init__)
# ----------------------------------------------------------------------------
def make_params(key, nz, orth=True):
    nout = 2 if orth else 3
    kw, kb = jax.random.split(key)
    # pred_layer.weight.data.normal_(0, 1e-5)
    w = jax.random.normal(kw, (nout, nz), jnp.float32) * 1e-5
    # bias keeps the PyTorch nn.Linear default init: U(-1/sqrt(nz), 1/sqrt(nz))
    bound = 1.0 / jnp.sqrt(jnp.float32(nz))
    b = jax.random.uniform(kb, (nout,), jnp.float32, -bound, bound)
    return w, b


if __name__ == "__main__":
    key = jax.random.PRNGKey(0)
    nz = 32
    k_feat, k_feat2, k_par = jax.random.split(key, 3)

    fwd = jax.jit(trans_predictor_forward, static_argnums=(3,))

    # Small batch (grid collapses to one step) and a batch that exercises
    # row padding + a 2-step parallel grid.
    feats = {
        2: jax.random.normal(k_feat, (2, nz), jnp.float32),
        33: jax.random.normal(k_feat2, (33, nz), jnp.float32),
    }

    for orth in (True, False):                 # [tx, ty] and [tx, ty, tz] heads
        nout = 2 if orth else 3
        w, b = make_params(k_par, nz, orth=orth)
        w_pad, b_pad = prepare_linear_params(w, b)

        for batch, feat in feats.items():
            trans = jax.block_until_ready(fwd(feat, w_pad, b_pad, nout))

            ref = feat @ w.T + b               # pure-JAX f32 reference
            assert trans.shape == (batch, nout), trans.shape
            assert jnp.all(jnp.isfinite(trans))
            assert jnp.allclose(trans, ref, rtol=1e-3, atol=1e-6), (
                float(jnp.max(jnp.abs(trans - ref))))

    print("KERNEL_OK")
</pallas_src>

<mosaic_0001>
module attributes {stable_mosaic.version = 11 : i64} {
  func.func @_linear_kernel(%arg0: i32, %arg1: memref<8x32xf32, #tpu.memory_space<vmem>>, %arg2: memref<32x128xf32, #tpu.memory_space<vmem>>, %arg3: memref<1x128xf32, #tpu.memory_space<vmem>>, %arg4: memref<8x2xf32, #tpu.memory_space<vmem>>) attributes {dimension_semantics = [#tpu.dimension_semantics<parallel>], iteration_bounds = array<i64: 1>, scalar_prefetch = 0 : i64, scratch_operands = 0 : i64, tpu.core_type = #tpu.core_type<tc>, window_params = [{transform_indices = @transform_0, window_bounds = array<i64: 8, 32>}, {pipeline_mode = #tpu.pipeline_mode<synchronous>, transform_indices = @transform_1, window_bounds = array<i64: 32, 128>}, {pipeline_mode = #tpu.pipeline_mode<synchronous>, transform_indices = @transform_2, window_bounds = array<i64: 1, 128>}, {transform_indices = @transform_3, window_bounds = array<i64: 8, 2>}]} {
    %c0 = arith.constant 0 : index
    %c0_0 = arith.constant 0 : index
    %0 = vector.load %arg1[%c0, %c0_0] : memref<8x32xf32, #tpu.memory_space<vmem>>, vector<8x32xf32>
    %c0_1 = arith.constant 0 : index
    %c0_2 = arith.constant 0 : index
    %1 = vector.load %arg2[%c0_1, %c0_2] : memref<32x128xf32, #tpu.memory_space<vmem>>, vector<32x128xf32>
    %cst = arith.constant dense<0.000000e+00> : vector<8x128xf32>
    %2 = tpu.matmul %0, %1, %cst {dimension_numbers = #tpu.dot_dimension_numbers<[1], [0], [0], [1], [0, 0, 1, 1], [], []>} : vector<8x32xf32>, vector<32x128xf32>, vector<8x128xf32> -> vector<8x128xf32>
    %c0_3 = arith.constant 0 : index
    %c0_4 = arith.constant 0 : index
    %3 = vector.load %arg3[%c0_3, %c0_4] : memref<1x128xf32, #tpu.memory_space<vmem>>, vector<1x128xf32>
    %4 = vector.broadcast %3 : vector<1x128xf32> to vector<8x128xf32>
    %5 = arith.addf %2, %4 : vector<8x128xf32>
    %6 = vector.extract_strided_slice %5 {offsets = [0, 0], sizes = [8, 2], strides = [1, 1]} : vector<8x128xf32> to vector<8x2xf32>
    %c0_5 = arith.constant 0 : index
    %c0_6 = arith.constant 0 : index
    %7 = vector.load %arg4[%c0_5, %c0_6] : memref<8x2xf32, #tpu.memory_space<vmem>>, vector<8x2xf32>
    tpu.vector_store %arg4[%c0_5, %c0_6], %6 {strides = array<i32>} : memref<8x2xf32, #tpu.memory_space<vmem>>, vector<8x2xf32>,
    return
  }
  func.func @transform_0(%arg0: i32) -> (i32, i32) {
    %c0_i32 = arith.constant 0 : i32
    %c0_i32_0 = arith.constant 0 : i32
    return %arg0, %c0_i32 : i32, i32
  }
  func.func @transform_1(%arg0: i32) -> (i32, i32) {
    %c0_i32 = arith.constant 0 : i32
    %c0_i32_0 = arith.constant 0 : i32
    %c0_i32_1 = arith.constant 0 : i32
    return %c0_i32, %c0_i32_0 : i32, i32
  }
  func.func @transform_2(%arg0: i32) -> (i32, i32) {
    %c0_i32 = arith.constant 0 : i32
    %c0_i32_0 = arith.constant 0 : i32
    %c0_i32_1 = arith.constant 0 : i32
    return %c0_i32, %c0_i32_0 : i32, i32
  }
  func.func @transform_3(%arg0: i32) -> (i32, i32) {
    %c0_i32 = arith.constant 0 : i32
    %c0_i32_0 = arith.constant 0 : i32
    return %arg0, %c0_i32 : i32, i32
  }
}

</mosaic_0001>

<llo_original>
// kernel: trans_predictor_forward.1
$region0: #{trans_predictor_forward.1}
  #allocation0 [shape = 'u32[]', space=smem, size = 0x4, offset = 0x4, fixed_abs, tag = 'smem constant byte address 0x4 - core index']
  #allocation1 [shape = 'u32[144,128]{1,0:T(1,128)}', space=vmem, size = 0x12000, scoped, tag = 'internal scratch']
  %s0 = inlined_call_operand.vmem [shape: f32[8,32], index: 0, kind: input, shape index: {}]
  %s1 = inlined_call_operand.hbm [shape: f32[32,128], index: 1, kind: input, shape index: {}]
  %s2 = inlined_call_operand.vmem [shape: f32[1,128], index: 2, kind: input, shape index: {}]
  %s3 = inlined_call_operand.vmem [shape: f32[8,2], index: 3, kind: output, shape index: {}]
  %s4 = sld [smem:[#allocation0]]
  $region26: #{trans_predictor_forward.1} parent=0
    _
  %s6 = ssub.s32 1, %s4
  %s7 = scalar_select 0, %s6, %s4
  $region1: #{trans_predictor_forward.1} parent=0
    #allocation2 [shape = 'u8[16384]{0}', space=vmem, size = 0x4000, scoped, tag = 'input window, operand 1, single buffered']
    #allocation3 [shape = 's32[1]{0}', space=sflag, size = 0x4, scoped, tag = 'scoped memory for trans_predictor_forward.1']
    %8 = vsyncpa [#allocation3], 0
    // Predicated region
    $region2: #{trans_predictor_forward.1} parent=1 // pred_check
      _
    $region3: #{trans_predictor_forward.1} parent=1 // pred_check_branch
      %10 = sbr.rel (0) target = $region5
    $region4: #{trans_predictor_forward.1} parent=1 // pred_region
      _
    $region5: #{trans_predictor_forward.1} parent=1 // pred_fallthru
      _
    // Predicated region
    $region6: #{trans_predictor_forward.1} parent=1 // pred_check
      _
    $region7: #{trans_predictor_forward.1} parent=1 // pred_check_branch
      %12 = sbr.rel (0) target = $region9
    $region8: #{trans_predictor_forward.1} parent=1 // pred_region
      %s14 = ssub.s32 512, 512
      %15 = vsyncadd [#allocation3], %s14
      %s16 = sshll.u32 [#allocation2], 4
      %s17 = int_to_ptr.vmem [resolvable:$true] %s16
      %22 = dma.hbm_to_vmem [thread:$0]  %s1, 512, %s17, [#allocation3], 128, 128, 8
    $region9: #{trans_predictor_forward.1} parent=1 // pred_fallthru
      _
    // Predicated region
    $region10: #{trans_predictor_forward.1} parent=1 // pred_check
      _
    $region11: #{trans_predictor_forward.1} parent=1 // pred_check_branch
      %24 = sbr.rel (0) target = $region13
    $region12: #{trans_predictor_forward.1} parent=1 // pred_region
      _
    $region13: #{trans_predictor_forward.1} parent=1 // pred_fallthru
      _
    // Predicated region
    $region14: #{trans_predictor_forward.1} parent=1 // pred_check
      _
    $region15: #{trans_predictor_forward.1} parent=1 // pred_check_branch
      %26 = sbr.rel (0) target = $region17
    $region16: #{trans_predictor_forward.1} parent=1 // pred_region
      %27 = dma.done [#allocation3], 512
    $region17: #{trans_predictor_forward.1} parent=1 // pred_fallthru
      _
    %v28 = vld [vmem:[%s0] sm:$0xff]
    %v29 = vld [vmem:[#allocation2] sm:$0xff]
    %v30 = vld [vmem:[#allocation2 + $0x8] sm:$0xff]
    %v31 = vld [vmem:[#allocation2 + $0x10] sm:$0xff]
    %v32 = vld [vmem:[#allocation2 + $0x18] sm:$0xff]
    %v33 = vld [vmem:[%s2] sm:$0x1]
    %v35 = vlaneseq
    %v36 = vshrl.u32 %v35, 7
    %v37 = vsub.s32 0, %v36
    %v38 = vrot.slane %v33, %v37
    %vm40 = vcmask 261120
    %v42 = vsel %vm40, %v28, 0
    %44 = vmatprep.subr.mxu0 0.0
    %45 = vmatpush1.msra.mxu0 %v29
    %46 = vmatprep.subr.mxu0 0.0
    %47 = vmatpush1.msra.mxu0 %v30
    %48 = vmatprep.subr.mxu0 0.0
    %49 = vmatpush1.msra.mxu0 %v31
    %50 = vmatprep.subr.mxu0 0.0
    %51 = vmatpush1.msra.mxu0 %v32
    %52 = vmatprep.subr.mxu0 0.0
    %53 = vmatpush1.msra.mxu0 0.0
    %54 = vmatprep.subr.mxu0 0.0
    %55 = vmatpush1.msra.mxu0 0.0
    %56 = vmatprep.subr.mxu0 0.0
    %57 = vmatpush1.msra.mxu0 0.0
    %58 = vmatprep.subr.mxu0 0.0
    %59 = vmatpush1.msra.mxu0 0.0
    %60 = vmatprep.subr.mxu0 0.0
    %61 = vmatpush1.msra.mxu0 0.0
    %62 = vmatprep.subr.mxu0 0.0
    %63 = vmatpush1.msra.mxu0 0.0
    %64 = vmatprep.subr.mxu0 0.0
    %65 = vmatpush1.msra.mxu0 0.0
    %66 = vmatprep.subr.mxu0 0.0
    %67 = vmatpush1.msra.mxu0 0.0
    %68 = vmatprep.subr.mxu0 0.0
    %69 = vmatpush1.msra.mxu0 0.0
    %70 = vmatprep.subr.mxu0 0.0
    %71 = vmatpush1.msra.mxu0 0.0
    %72 = vmatprep.subr.mxu0 0.0
    %73 = vmatpush1.msra.mxu0 0.0
    %74 = vmatprep.subr.mxu0 0.0
    %75 = vmatpush1.msra.mxu0 0.0
    %76 = vmatprep.subr.mxu0 0.0
    %77 = vmatpush1.msra.mxu0 0.0
    %78 = vmatprep.subr.mxu0 0.0
    %79 = vmatpush1.msra.mxu0 0.0
    %80 = vmatprep.subr.mxu0 0.0
    %81 = vmatpush1.msra.mxu0 0.0
    %82 = vmatprep.subr.mxu0 0.0
    %83 = vmatpush1.msra.mxu0 0.0
    %84 = vmatprep.subr.mxu0 0.0
    %85 = vmatpush1.msra.mxu0 0.0
    %86 = vmatprep.subr.mxu0 0.0
    %87 = vmatpush1.msra.mxu0 0.0
    %88 = vmatprep.subr.mxu0 0.0
    %89 = vmatpush1.msra.mxu0 0.0
    %90 = vmatprep.subr.mxu0 0.0
    %91 = vmatpush1.msra.mxu0 0.0
    %92 = vmatprep.subr.mxu0 0.0
    %93 = vmatpush1.msra.mxu0 0.0
    %94 = vmatprep.subr.mxu0 0.0
    %95 = vmatpush1.msra.mxu0 0.0
    %96 = vmatprep.subr.mxu0 0.0
    %97 = vmatpush1.msra.mxu0 0.0
    %98 = vmatprep.subr.mxu0 0.0
    %99 = vmatpush1.msra.mxu0 0.0
    %100 = vmatprep.subr.mxu0 0.0
    %101 = vmatpush1.msra.mxu0 0.0
    %102 = vmatprep.subr.mxu0 0.0
    %103 = vmatpush1.msra.mxu0 0.0
    %104 = vmatprep.subr.mxu0 0.0
    %105 = vmatpush1.msra.mxu0 0.0
    %106 = vmatprep.subr.mxu0 0.0
    %107 = vmatpush1.msra.mxu0 0.0
    %108 = vmatprep.mubr.f32.mxu0 0.0
    %109 = vmatmul.mubr.f32.gmra.mrb[0].mxu0 %v42
    %v110 = vpop.f32.mrb[0].mxu0
    %v111 = vadd.f32 %v38, %v110
    %v112 = vpop.f32.mrb[0].mxu0
    %113 = vdwg.mxu0
    %vm114 = vcmask 15360
    %115 = vst.msk [vmem:[%s3] sm:$0xff] %vm114, %v111
    // Predicated region
    $region18: #{trans_predictor_forward.1} parent=1 // pred_check
      _
    $region19: #{trans_predictor_forward.1} parent=1 // pred_check_branch
      %117 = sbr.rel (0) target = $region21
    $region20: #{trans_predictor_forward.1} parent=1 // pred_region
      _
    $region21: #{trans_predictor_forward.1} parent=1 // pred_fallthru
      _
    // Predicated region
    $region22: #{trans_predictor_forward.1} parent=1 // pred_check
      _
    $region23: #{trans_predictor_forward.1} parent=1 // pred_check_branch
      %119 = sbr.rel (0) target = $region25
    $region24: #{trans_predictor_forward.1} parent=1 // pred_region
      _
    $region25: #{trans_predictor_forward.1} parent=1 // pred_fallthru
      _
    %120 = vsyncpa [#allocation3], 1

</llo_original>
